<compile_context>
chip_gen: v7x
topology: tpu7x:2x2x1
jax: 0.10.0
libtpu: 0.0.40
codegen_flags: <defaults>
</compile_context>

<pallas_src>
import functools
import math

import jax
import jax.numpy as jnp
from jax.experimental import pallas as pl
from jax.experimental.pallas import tpu as pltpu


_BLOCK_BYTE_BUDGET = 2 * 1024 * 1024  # per-block cap (~4 live buffers in VMEM)


def _copy_block_kernel(x_ref, o_ref):
    # Swap fully absorbed into the out BlockSpec index_map: pure tile copy.
    o_ref[...] = x_ref[...]


def _swap_block_kernel(x_ref, o_ref, *, i, j):
    # Bounded in-VMEM relayout of one tile (sublane shuffle, or a per-tile
    # lane transpose when j is the last axis).
    o_ref[...] = jnp.swapaxes(x_ref[...], i, j)


def _pick_tile(size, target, align):
    """Largest multiple of `align` that evenly divides `size` and is <= target.

    Falls back to the full `size` (always legal: block dim equal to the array dim).
    """
    if size <= target:
        return size
    t = (max(target, align) // align) * align
    while t >= align:
        if size % t == 0:
            return t
        t -= align
    return size


def _pick_div(size, target):
    """Largest divisor of `size` <= target (leading dims: no alignment rule)."""
    if size <= target:
        return size
    for t in range(min(size, max(int(target), 1)), 0, -1):
        if size % t == 0:
            return t
    return 1


def _build_block_shape(shape, i, j, itemsize, budget_bytes=_BLOCK_BYTE_BUDGET):
    """Input block shape for transpose(i, j), i < j, respecting (8,128) tiling
    constraints on both the input block and the (axis-swapped) output block."""
    n = len(shape)
    last, sub = n - 1, n - 2
    blk = [1] * n
    budget_elems = max(budget_bytes // max(itemsize, 1), 1)

    def room():
        prod = 1
        for b in blk:
            prod *= b
        return max(budget_elems // prod, 1)

    if j == last:
        if i == sub:
            # Pure 2-D transpose of the last two dims: big square-ish
            # 128-aligned tiles (both tile dims land on a lane axis, in or out).
            cap = max(128, int(math.isqrt(budget_elems)))
            blk[i] = _pick_tile(shape[i], min(512, cap), 128)       # -> out lane
            blk[last] = _pick_tile(shape[last], max(128, min(512, room())), 128)
        else:
            # Lane axis swapped with a leading axis; leave room for an
            # 8-aligned sublane tile as well.
            blk[i] = _pick_tile(shape[i], 256, 128)                 # -> out lane
            blk[last] = _pick_tile(shape[last], 256, 128)
            blk[sub] = _pick_tile(shape[sub], max(room(), 8), 8)
    elif j == sub:
        # Sublane axis swapped with a leading axis: lane dim untouched, kept
        # lane-dense (128-aligned or full) and as large as the budget allows.
        blk[last] = _pick_tile(shape[last], max(128, budget_elems // 64), 128)
        t = max(8, int(math.isqrt(room())))
        blk[sub] = _pick_tile(shape[sub], min(256, t), 8)               # t_j
        blk[i] = _pick_tile(shape[i], min(256, max(room(), 8)), 8)      # -> out sublane
    else:
        # Both swapped axes are leading dims: block size 1 on each; the whole
        # permutation is done by the out index_map and the kernel is a pure copy.
        blk[last] = _pick_tile(shape[last], max(128, budget_elems // 8), 128)
        blk[sub] = _pick_tile(shape[sub], max(room(), 8), 8)
        # Fatten each DMA via the non-swapped leading dims (innermost first).
        for ax in range(sub - 1, -1, -1):
            if ax in (i, j):
                continue
            blk[ax] = _pick_div(shape[ax], room())
    return tuple(blk)


def transpose_pallas(x, i, j):
    """Pallas TPU implementation of torch.Tensor.transpose(i, j)."""
    n = x.ndim
    i %= n
    j %= n
    if i == j:
        # Identity: the cheapest bytes are the ones never moved.
        return x
    if i > j:
        i, j = j, i

    out_shape = list(x.shape)
    out_shape[i], out_shape[j] = out_shape[j], out_shape[i]
    out_shape = tuple(out_shape)

    itemsize = jnp.dtype(x.dtype).itemsize
    in_block = _build_block_shape(x.shape, i, j, itemsize)
    out_block = list(in_block)
    out_block[i], out_block[j] = out_block[j], out_block[i]
    out_block = tuple(out_block)

    grid = tuple(pl.cdiv(d, b) for d, b in zip(x.shape, in_block))

    def in_index_map(*g):
        return g

    def out_index_map(*g):
        g = list(g)
        g[i], g[j] = g[j], g[i]
        return tuple(g)

    if in_block[i] == 1 and in_block[j] == 1:
        kernel = _copy_block_kernel
    else:
        kernel = functools.partial(_swap_block_kernel, i=i, j=j)

    total_bytes = int(x.size) * itemsize
    return pl.pallas_call(
        kernel,
        out_shape=jax.ShapeDtypeStruct(out_shape, x.dtype),
        grid=grid,
        in_specs=[pl.BlockSpec(in_block, in_index_map)],
        out_specs=pl.BlockSpec(out_block, out_index_map),
        compiler_params=pltpu.CompilerParams(
            dimension_semantics=("parallel",) * len(grid)),
        cost_estimate=pl.CostEstimate(
            flops=0, transcendentals=0, bytes_accessed=2 * total_bytes),
    )(x)


if __name__ == "__main__":
    key = jax.random.PRNGKey(0)
    # Small NCHW input, consistent with TransposeLayer(1, 2) on a conv-style tensor.
    B, C, H, W = 2, 4, 16, 16
    x = jax.random.normal(key, (B, C, H, W), dtype=jnp.float32)

    # Primary case from the module spec: TransposeLayer(1, 2).
    i, j = 1, 2
    out = jax.block_until_ready(transpose_pallas(x, i, j))
    ref = jnp.swapaxes(x, i, j)
    assert out.shape == (B, H, C, W), out.shape
    assert out.dtype == x.dtype
    assert jnp.array_equal(out, ref), "Pallas transpose(1,2) mismatch"

    # Exercise the other tiling paths as well (lane swap, leading-dim swap, identity).
    out23 = jax.block_until_ready(transpose_pallas(x, 2, 3))
    assert jnp.array_equal(out23, jnp.swapaxes(x, 2, 3)), "Pallas transpose(2,3) mismatch"

    out01 = jax.block_until_ready(transpose_pallas(x, 0, 1))
    assert jnp.array_equal(out01, jnp.swapaxes(x, 0, 1)), "Pallas transpose(0,1) mismatch"

    # Negative-index form (torch allows it) and identity short-circuit.
    outn = jax.block_until_ready(transpose_pallas(x, -2, -1))
    assert jnp.array_equal(outn, jnp.swapaxes(x, -2, -1)), "Pallas transpose(-2,-1) mismatch"
    out_id = transpose_pallas(x, 1, 1)
    assert out_id is x, "identity transpose should not move data"

    print("KERNEL_OK")
</pallas_src>

<mosaic_0001>
module attributes {stable_mosaic.version = 11 : i64} {
  func.func @_swap_block_kernel(%arg0: i32, %arg1: i32, %arg2: i32, %arg3: i32, %arg4: memref<1x4x16x16xf32, #tpu.memory_space<vmem>>, %arg5: memref<1x16x4x16xf32, #tpu.memory_space<vmem>>) attributes {dimension_semantics = [#tpu.dimension_semantics<parallel>, #tpu.dimension_semantics<parallel>, #tpu.dimension_semantics<parallel>, #tpu.dimension_semantics<parallel>], iteration_bounds = array<i64: 2, 1, 1, 1>, scalar_prefetch = 0 : i64, scratch_operands = 0 : i64, tpu.core_type = #tpu.core_type<tc>, window_params = [{transform_indices = @transform_0, window_bounds = array<i64: 1, 4, 16, 16>}, {transform_indices = @transform_1, window_bounds = array<i64: 1, 16, 4, 16>}]} {
    %c0 = arith.constant 0 : index
    %c0_0 = arith.constant 0 : index
    %c0_1 = arith.constant 0 : index
    %c0_2 = arith.constant 0 : index
    %0 = vector.load %arg4[%c0, %c0_0, %c0_1, %c0_2] : memref<1x4x16x16xf32, #tpu.memory_space<vmem>>, vector<1x4x16x16xf32>
    %1 = tpu.transpose %0, [0, 2, 1, 3] : vector<1x4x16x16xf32> -> vector<1x16x4x16xf32>
    %c0_3 = arith.constant 0 : index
    %c0_4 = arith.constant 0 : index
    %c0_5 = arith.constant 0 : index
    %c0_6 = arith.constant 0 : index
    %2 = vector.load %arg5[%c0_3, %c0_4, %c0_5, %c0_6] : memref<1x16x4x16xf32, #tpu.memory_space<vmem>>, vector<1x16x4x16xf32>
    tpu.vector_store %arg5[%c0_3, %c0_4, %c0_5, %c0_6], %1 {strides = array<i32>} : memref<1x16x4x16xf32, #tpu.memory_space<vmem>>, vector<1x16x4x16xf32>,
    return
  }
  func.func @transform_0(%arg0: i32, %arg1: i32, %arg2: i32, %arg3: i32) -> (i32, i32, i32, i32) {
    %c0_i32 = arith.constant 0 : i32
    return %arg0, %arg1, %arg2, %arg3 : i32, i32, i32, i32
  }
  func.func @transform_1(%arg0: i32, %arg1: i32, %arg2: i32, %arg3: i32) -> (i32, i32, i32, i32) {
    %c0_i32 = arith.constant 0 : i32
    return %arg0, %arg2, %arg1, %arg3 : i32, i32, i32, i32
  }
}

</mosaic_0001>

<llo_original>
// kernel: tpu_custom_call.1
$region0: #{tpu_custom_call.1}
  #allocation0 [shape = 'u32[]', space=smem, size = 0x4, offset = 0x4, fixed_abs, tag = 'smem constant byte address 0x4 - core index']
  #allocation1 [shape = 'u32[144,128]{1,0:T(1,128)}', space=vmem, size = 0x12000, scoped, tag = 'internal scratch']
  %s0 = inlined_call_operand.hbm [shape: f32[2,4,16,16], index: 0, kind: input, shape index: {}]
  %s1 = inlined_call_operand.hbm [shape: f32[2,16,4,16], index: 1, kind: output, shape index: {}]
  %s2 = sld [smem:[#allocation0]]
  $region41: #{tpu_custom_call.1} parent=0
    _
  %s4 = ssub.s32 1, %s2
  %s5 = scalar_select 0, %s4, %s2
  $region1: #{tpu_custom_call.1} parent=0
    #allocation2 [shape = 'u8[65536]{0}', space=vmem, size = 0x10000, scoped, tag = 'input window, operand 0']
    #allocation3 [shape = 's32[2]{0}', space=sflag, size = 0x8, scoped, tag = 'scoped memory for tpu_custom_call.1']
    #allocation4 [shape = 's32[2]{0}', space=sflag, size = 0x8, scoped, tag = 'scoped memory for tpu_custom_call.1']
    #allocation5 [shape = 'u8[65536]{0}', space=vmem, size = 0x10000, scoped, tag = 'output window, operand 0']
    %6 = vsyncpa [#allocation3], 0
    %s7 = scalar_lea.sflag [#allocation3], 1
    %8 = vsyncpa %s7, 0
    %9 = vsyncpa [#allocation4], 0
    %s10 = scalar_lea.sflag [#allocation4], 1
    %11 = vsyncpa %s10, 0
    loop: start=0, step=1, limit=4
    $region2: #{tpu_custom_call.1} parent=1 // loop_pre_header
      _
    $region3: #{tpu_custom_call.1} parent=1 // loop_header
      %s13 = sphi 0, %s17
      %p14 = scmp.ge.s32.totalorder %s13, 4
      %s20 = sphi 0, %s46
      %s21 = sphi 0, %s42
      %s22 = sphi 0, %s38
      %s23 = sphi 0, %s34
      %s24 = sphi 0, %s20
      %s25 = sphi 0, %s21
      %s26 = sphi 0, %s22
      %s27 = sphi 0, %s23
      %s28 = sphi 0, %s24
      %s29 = sphi 0, %s25
      %s30 = sphi 0, %s26
      %s31 = sphi 0, %s27
      %s55 = sphi 0, %s57
      %s58 = sphi 0, %s55
      %s59 = sphi 0, %s58
      %s75 = sphi 0, %s59
      %s87 = sphi 0, %s89
      %s90 = sphi 0, %s87
      %s91 = sphi 0, %s90
      %s107 = sphi 0, %s91
    $region4: #{tpu_custom_call.1} parent=1 // loop_header_branch
      %16 = sbr.rel (%p14) target = $region8
    $region5: #{tpu_custom_call.1} parent=1 // loop_body
      %s18 = ssub.s32 %s13, 1
      %s19 = ssub.s32 %s13, 2
      %s32 = sadd.s32 1, %s23
      %p33 = scmp.ge.s32.totalorder %s32, 1
      %s34 = scalar_select %p33, 0, %s32
      %s35 = sadd.s32 1, %s22
      %s36 = scalar_select %p33, %s35, %s22
      %p37 = scmp.ge.s32.totalorder %s36, 1
      %s38 = scalar_select %p37, 0, %s36
      %s39 = sadd.s32 1, %s21
      %s40 = scalar_select %p37, %s39, %s21
      %p41 = scmp.ge.s32.totalorder %s40, 1
      %s42 = scalar_select %p41, 0, %s40
      %s43 = sadd.s32 1, %s20
      %s44 = scalar_select %p41, %s43, %s20
      %p45 = scmp.ge.s32.totalorder %s44, 2
      %s46 = scalar_select %p45, 0, %s44
      %s47 = ssub.s32 %s20, %s46
      %s48 = ssub.s32 %s21, %s42
      %s49 = sor.u32 %s47, %s48
      %s50 = ssub.s32 %s22, %s38
      %s51 = sor.u32 %s49, %s50
      %s52 = ssub.s32 %s23, %s34
      %s53 = sor.u32 %s51, %s52
      %p54 = scmp.eq.s32.totalorder %s53, 0
      %s56 = sadd.s32 %s55, 1
      %s57 = scalar_select %p54, %s55, %s56
      %p60 = pneg %p54
      %p61 = scmp.eq.s32.totalorder %s13, 1
      %p62 = por %p60, %p61
      %p63 = scmp.ne.s32.totalorder %s55, %s58
      %p64 = scmp.eq.s32.totalorder %s13, 0
      %p65 = por %p63, %p64
      %p66 = scmp.ne.s32.totalorder %s55, %s58
      %p67 = scmp.eq.s32.totalorder %s18, 1
      %p68 = por %p66, %p67
      %p69 = scmp.ne.s32.totalorder %s58, %s59
      %p70 = scmp.eq.s32.totalorder %s18, 0
      %p71 = por %p69, %p70
      %p72 = scmp.ne.s32.totalorder %s58, %s59
      %p73 = scmp.eq.s32.totalorder %s19, 1
      %p74 = por %p72, %p73
      %p76 = scmp.ne.s32.totalorder %s59, %s75
      %p77 = scmp.eq.s32.totalorder %s19, 0
      %p78 = por %p76, %p77
      %s79 = ssub.s32 %s20, %s46
      %s80 = ssub.s32 %s22, %s38
      %s81 = sor.u32 %s79, %s80
      %s82 = ssub.s32 %s21, %s42
      %s83 = sor.u32 %s81, %s82
      %s84 = ssub.s32 %s23, %s34
      %s85 = sor.u32 %s83, %s84
      %p86 = scmp.eq.s32.totalorder %s85, 0
      %s88 = sadd.s32 %s87, 1
      %s89 = scalar_select %p86, %s87, %s88
      %p92 = pneg %p86
      %p93 = scmp.eq.s32.totalorder %s13, 1
      %p94 = por %p92, %p93
      %p95 = scmp.ne.s32.totalorder %s87, %s90
      %p96 = scmp.eq.s32.totalorder %s13, 0
      %p97 = por %p95, %p96
      %p98 = scmp.ne.s32.totalorder %s87, %s90
      %p99 = scmp.eq.s32.totalorder %s18, 1
      %p100 = por %p98, %p99
      %p101 = scmp.ne.s32.totalorder %s90, %s91
      %p102 = scmp.eq.s32.totalorder %s18, 0
      %p103 = por %p101, %p102
      %p104 = scmp.ne.s32.totalorder %s90, %s91
      %p105 = scmp.eq.s32.totalorder %s19, 1
      %p106 = por %p104, %p105
      %p108 = scmp.ne.s32.totalorder %s91, %s107
      %p109 = scmp.eq.s32.totalorder %s19, 0
      %p110 = por %p108, %p109
      %p111 = scmp.le.s32.totalorder 1, %s13
      %p112 = scmp.lt.s32.totalorder %s13, 3
      %p113 = pnand %p111, %p112
      %p114 = pneg %p113
      // Predicated region
      $region9: #{tpu_custom_call.1} parent=5 // pred_check
        _
      $region10: #{tpu_custom_call.1} parent=5 // pred_check_branch
        %116 = sbr.rel (%p113) target = $region12
      $region11: #{tpu_custom_call.1} parent=5 // pred_region
        %s117 = ssub.s32 %s13, 1
      $region12: #{tpu_custom_call.1} parent=5 // pred_fallthru
        _
      %p118 = scmp.lt.s32.totalorder %s13, 2
      // Predicated region
      $region13: #{tpu_custom_call.1} parent=5 // pred_check
        %p119 = pneg %p118
      $region14: #{tpu_custom_call.1} parent=5 // pred_check_branch
        %121 = sbr.rel (%p119) target = $region16
      $region15: #{tpu_custom_call.1} parent=5 // pred_region
        // Predicated region
        $region17: #{tpu_custom_call.1} parent=15 // pred_check
          %p122 = pneg %p65
        $region18: #{tpu_custom_call.1} parent=15 // pred_check_branch
          %124 = sbr.rel (%p122) target = $region20
        $region19: #{tpu_custom_call.1} parent=15 // pred_region
          %s125 = sand.u32 %s55, 1
          %s126 = scalar_lea.sflag [#allocation3], %s125
          %s127 = sand.u32 %s55, 1
          %s128 = smul.addr %s127, 64
          %s129 = scalar_lea.vmem [#allocation2], %s128
          %s130 = smul.u32 4, %s21
          %s131 = smul.u32 2, %s22
          %s133 = ssub.s32 1024, 1024
          %134 = vsyncadd %s126, %s133
          %s135 = sadd.s32 %s23, %s131
          %s136 = smul.addr %s130, 2
          %s137 = sadd.s32 %s135, %s136
          %s138 = smul.addr %s20, 8
          %s139 = sadd.s32 %s137, %s138
          %s140 = smul.addr %s139, 128
          %s141 = scalar_lea.hbm %s0, %s140
          %s142 = sshll.u32 %s129, 4
          %s143 = int_to_ptr.vmem [resolvable:$true] %s142
          %148 = dma.hbm_to_vmem [thread:$0]  %s141, 1024, %s143, %s126, 128, 128, 8
        $region20: #{tpu_custom_call.1} parent=15 // pred_fallthru
          _
      $region16: #{tpu_custom_call.1} parent=5 // pred_fallthru
        _
      %p149 = scmp.le.s32.totalorder 1, %s13
      %p150 = scmp.lt.s32.totalorder %s13, 3
      %p151 = pnand %p149, %p150
      %p152 = pneg %p151
      // Predicated region
      $region21: #{tpu_custom_call.1} parent=5 // pred_check
        _
      $region22: #{tpu_custom_call.1} parent=5 // pred_check_branch
        %154 = sbr.rel (%p151) target = $region24
      $region23: #{tpu_custom_call.1} parent=5 // pred_region
        %s155 = ssub.s32 %s13, 1
        %s156 = sand.u32 %s58, 1
        %s157 = scalar_lea.sflag [#allocation3], %s156
        %s158 = sand.u32 %s58, 1
        %s159 = smul.addr %s158, 64
        %s160 = scalar_lea.vmem [#allocation2], %s159
        // Predicated region
        $region25: #{tpu_custom_call.1} parent=23 // pred_check
          %p161 = pneg %p71
        $region26: #{tpu_custom_call.1} parent=23 // pred_check_branch
          %163 = sbr.rel (%p161) target = $region28
        $region27: #{tpu_custom_call.1} parent=23 // pred_region
          %164 = dma.done %s157, 1024
        $region28: #{tpu_custom_call.1} parent=23 // pred_fallthru
          _
        %s165 = sand.u32 %s58, 1
        %s166 = scalar_lea.sflag [#allocation3], %s165
        %s167 = sand.u32 %s58, 1
        %s168 = smul.addr %s167, 64
        %s169 = scalar_lea.vmem [#allocation2], %s168
        %p170 = pneg %p71
        %p171 = pneg %p68
        %p172 = pneg %p103
        %p173 = pneg %p100
        %s174 = sand.u32 %s90, 1
        %s175 = scalar_lea.sflag [#allocation4], %s174
        %s176 = sand.u32 %s90, 1
        %s177 = smul.addr %s176, 64
        %s178 = scalar_lea.vmem [#allocation5], %s177
        %s179 = smul.u32 4, %s25
        %s180 = smul.u32 2, %s26
        %s181 = smul.u32 16, %s26
        %v182 = vld [vmem:[%s160] sm:$0xff]
        %v183 = vld [vmem:[%s160 + $0x8] sm:$0xff]
        %v184 = vld [vmem:[%s160 + $0x10] sm:$0xff]
        %v185 = vld [vmem:[%s160 + $0x18] sm:$0xff]
        %v186 = vld [vmem:[%s160 + $0x20] sm:$0xff]
        %v187 = vld [vmem:[%s160 + $0x28] sm:$0xff]
        %v188 = vld [vmem:[%s160 + $0x30] sm:$0xff]
        %v189 = vld [vmem:[%s160 + $0x38] sm:$0xff]
        %v190 = vcombine.low %v182, %v186
        %v191 = vcombine.high %v182, %v186
        %v193 = vunpack.c.l.s4 1983009808
        %v194 = vunpack.c.0.s8 %v193
        %v195 = vlaneseq
        %v196 = vshrl.u32 %v195, 7
        %v197 = vsub.s32 %v194, %v196
        %v198 = vrot.slane %v190, %v197
        %v200 = vunpack.c.l.s4 1983009808
        %v201 = vunpack.c.0.s8 %v200
        %v202 = vlaneseq
        %v203 = vshrl.u32 %v202, 7
        %v204 = vsub.s32 %v201, %v203
        %v205 = vrot.slane %v191, %v204
        %v206 = vcombine.low %v184, %v188
        %v207 = vcombine.high %v184, %v188
        %v209 = vunpack.c.l.s4 1983009808
        %v210 = vunpack.c.0.s8 %v209
        %v211 = vlaneseq
        %v212 = vshrl.u32 %v211, 7
        %v213 = vsub.s32 %v210, %v212
        %v214 = vrot.slane %v206, %v213
        %v216 = vunpack.c.l.s4 1983009808
        %v217 = vunpack.c.0.s8 %v216
        %v218 = vlaneseq
        %v219 = vshrl.u32 %v218, 7
        %v220 = vsub.s32 %v217, %v219
        %v221 = vrot.slane %v207, %v220
        %v222 = vcombine.low %v198, %v214
        %v223 = vcombine.high %v198, %v214
        %v225 = vunpack.c.l.s4 1934713408
        %v226 = vunpack.c.0.s8 %v225
        %v227 = vlaneseq
        %v228 = vshrl.u32 %v227, 7
        %v229 = vsub.s32 %v226, %v228
        %v230 = vrot.slane %v222, %v229
        %v232 = vunpack.c.l.s4 1934713408
        %v233 = vunpack.c.0.s8 %v232
        %v234 = vlaneseq
        %v235 = vshrl.u32 %v234, 7
        %v236 = vsub.s32 %v233, %v235
        %v237 = vrot.slane %v223, %v236
        %v238 = vcombine.low %v205, %v221
        %v239 = vcombine.high %v205, %v221
        %v241 = vunpack.c.l.s4 1934713408
        %v242 = vunpack.c.0.s8 %v241
        %v243 = vlaneseq
        %v244 = vshrl.u32 %v243, 7
        %v245 = vsub.s32 %v242, %v244
        %v246 = vrot.slane %v238, %v245
        %v248 = vunpack.c.l.s4 1934713408
        %v249 = vunpack.c.0.s8 %v248
        %v250 = vlaneseq
        %v251 = vshrl.u32 %v250, 7
        %v252 = vsub.s32 %v249, %v251
        %v253 = vrot.slane %v239, %v252
        %v254 = vcombine.high %v230, 0.0
        %v255 = vcombine.high %v237, 0.0
        %v256 = vcombine.high %v246, 0.0
        %v257 = vcombine.high %v253, 0.0
        %v258 = vcombine.low %v183, %v187
        %v259 = vcombine.high %v183, %v187
        %v261 = vunpack.c.l.s4 1983009808
        %v262 = vunpack.c.0.s8 %v261
        %v263 = vlaneseq
        %v264 = vshrl.u32 %v263, 7
        %v265 = vsub.s32 %v262, %v264
        %v266 = vrot.slane %v258, %v265
        %v268 = vunpack.c.l.s4 1983009808
        %v269 = vunpack.c.0.s8 %v268
        %v270 = vlaneseq
        %v271 = vshrl.u32 %v270, 7
        %v272 = vsub.s32 %v269, %v271
        %v273 = vrot.slane %v259, %v272
        %v274 = vcombine.low %v185, %v189
        %v275 = vcombine.high %v185, %v189
        %v277 = vunpack.c.l.s4 1983009808
        %v278 = vunpack.c.0.s8 %v277
        %v279 = vlaneseq
        %v280 = vshrl.u32 %v279, 7
        %v281 = vsub.s32 %v278, %v280
        %v282 = vrot.slane %v274, %v281
        %v284 = vunpack.c.l.s4 1983009808
        %v285 = vunpack.c.0.s8 %v284
        %v286 = vlaneseq
        %v287 = vshrl.u32 %v286, 7
        %v288 = vsub.s32 %v285, %v287
        %v289 = vrot.slane %v275, %v288
        %v290 = vcombine.low %v266, %v282
        %v291 = vcombine.high %v266, %v282
        %v293 = vunpack.c.l.s4 1934713408
        %v294 = vunpack.c.0.s8 %v293
        %v295 = vlaneseq
        %v296 = vshrl.u32 %v295, 7
        %v297 = vsub.s32 %v294, %v296
        %v298 = vrot.slane %v290, %v297
        %v300 = vunpack.c.l.s4 1934713408
        %v301 = vunpack.c.0.s8 %v300
        %v302 = vlaneseq
        %v303 = vshrl.u32 %v302, 7
        %v304 = vsub.s32 %v301, %v303
        %v305 = vrot.slane %v291, %v304
        %v306 = vcombine.low %v273, %v289
        %v307 = vcombine.high %v273, %v289
        %v309 = vunpack.c.l.s4 1934713408
        %v310 = vunpack.c.0.s8 %v309
        %v311 = vlaneseq
        %v312 = vshrl.u32 %v311, 7
        %v313 = vsub.s32 %v310, %v312
        %v314 = vrot.slane %v306, %v313
        %v316 = vunpack.c.l.s4 1934713408
        %v317 = vunpack.c.0.s8 %v316
        %v318 = vlaneseq
        %v319 = vshrl.u32 %v318, 7
        %v320 = vsub.s32 %v317, %v319
        %v321 = vrot.slane %v307, %v320
        %v322 = vcombine.high %v298, 0.0
        %v323 = vcombine.high %v305, 0.0
        %v324 = vcombine.high %v314, 0.0
        %v325 = vcombine.high %v321, 0.0
        %vm326 = vcmask 125952
        %327 = vst.msk [vmem:[%s178] sm:$0xf] %vm326, %v230
        %328 = vst.msk [vmem:[%s178 + $0x4] sm:$0xf] %vm326, %v254
        %329 = vst.msk [vmem:[%s178 + $0x8] sm:$0xf] %vm326, %v237
        %330 = vst.msk [vmem:[%s178 + $0xc] sm:$0xf] %vm326, %v255
        %331 = vst.msk [vmem:[%s178 + $0x10] sm:$0xf] %vm326, %v246
        %332 = vst.msk [vmem:[%s178 + $0x14] sm:$0xf] %vm326, %v256
        %333 = vst.msk [vmem:[%s178 + $0x18] sm:$0xf] %vm326, %v253
        %334 = vst.msk [vmem:[%s178 + $0x1c] sm:$0xf] %vm326, %v257
        %335 = vst.msk [vmem:[%s178 + $0x20] sm:$0xf] %vm326, %v298
        %336 = vst.msk [vmem:[%s178 + $0x24] sm:$0xf] %vm326, %v322
        %337 = vst.msk [vmem:[%s178 + $0x28] sm:$0xf] %vm326, %v305
        %338 = vst.msk [vmem:[%s178 + $0x2c] sm:$0xf] %vm326, %v323
        %339 = vst.msk [vmem:[%s178 + $0x30] sm:$0xf] %vm326, %v314
        %340 = vst.msk [vmem:[%s178 + $0x34] sm:$0xf] %vm326, %v324
        %341 = vst.msk [vmem:[%s178 + $0x38] sm:$0xf] %vm326, %v321
        %342 = vst.msk [vmem:[%s178 + $0x3c] sm:$0xf] %vm326, %v325
        %s343 = sand.u32 %s90, 1
        %s344 = scalar_lea.sflag [#allocation4], %s343
        %s345 = sand.u32 %s90, 1
        %s346 = smul.addr %s345, 64
        %s347 = scalar_lea.vmem [#allocation5], %s346
        // Predicated region
        $region29: #{tpu_custom_call.1} parent=23 // pred_check
          %p348 = pneg %p100
        $region30: #{tpu_custom_call.1} parent=23 // pred_check_branch
          %350 = sbr.rel (%p348) target = $region32
        $region31: #{tpu_custom_call.1} parent=23 // pred_region
          %s351 = smul.u32 16, %s26
          %s353 = ssub.s32 1024, 1024
          %354 = vsyncadd %s344, %s353
          %s355 = sadd.s32 %s27, %s25
          %s356 = sadd.s32 %s355, %s351
          %s357 = smul.addr %s24, 16
          %s358 = sadd.s32 %s356, %s357
          %s359 = smul.addr %s358, 64
          %s360 = scalar_lea.hbm %s1, %s359
          %s361 = sshll.u32 %s347, 4
          %s362 = int_to_ptr.vmem [resolvable:$true] %s361
          %367 = dma.vmem_to_hbm [thread:$0]  %s362, 1024, %s360, %s344, 64, 64, 4
        $region32: #{tpu_custom_call.1} parent=23 // pred_fallthru
          _
      $region24: #{tpu_custom_call.1} parent=5 // pred_fallthru
        _
      %p368 = scmp.le.s32.totalorder 2, %s13
      // Predicated region
      $region33: #{tpu_custom_call.1} parent=5 // pred_check
        %p369 = pneg %p368
      $region34: #{tpu_custom_call.1} parent=5 // pred_check_branch
        %371 = sbr.rel (%p369) target = $region36
      $region35: #{tpu_custom_call.1} parent=5 // pred_region
        %s372 = ssub.s32 %s13, 2
        // Predicated region
        $region37: #{tpu_custom_call.1} parent=35 // pred_check
          %p373 = pneg %p106
        $region38: #{tpu_custom_call.1} parent=35 // pred_check_branch
          %375 = sbr.rel (%p373) target = $region40
        $region39: #{tpu_custom_call.1} parent=35 // pred_region
          %s376 = sand.u32 %s91, 1
          %s377 = scalar_lea.sflag [#allocation4], %s376
          %s378 = sand.u32 %s91, 1
          %s379 = smul.addr %s378, 64
          %s380 = scalar_lea.vmem [#allocation5], %s379
          %381 = dma.done %s377, 1024
        $region40: #{tpu_custom_call.1} parent=35 // pred_fallthru
          _
      $region36: #{tpu_custom_call.1} parent=5 // pred_fallthru
        _
    $region6: #{tpu_custom_call.1} parent=1 // loop_footer
      %s17 = sadd.s32 1, %s13
    $region7: #{tpu_custom_call.1} parent=1 // loop_footer_branch
      %12 = sbr.rel target = $region3
    $region8: #{tpu_custom_call.1} parent=1 // loop_exit
      _
    %382 = vsyncpa [#allocation3], 1
    %s383 = scalar_lea.sflag [#allocation3], 1
    %384 = vsyncpa %s383, 1
    %385 = vsyncpa [#allocation4], 1
    %s386 = scalar_lea.sflag [#allocation4], 1
    %387 = vsyncpa %s386, 1

</llo_original>
